<compile_context>
chip_gen: v6e
topology: v6e:2x2x1
jax: 0.10.0
libtpu: 0.0.40
codegen_flags: <defaults>
</compile_context>

<pallas_src>
import functools
import math

import jax
import jax.numpy as jnp
from jax.experimental import pallas as pl
from jax.experimental.pallas import tpu as pltpu

_LANE = 128
_SUBLANE = 8

# Physical per-core VMEM (trace-time hardware query; conservative fallback).
try:
    _VMEM_CAP = int(pltpu.get_tpu_info().vmem_capacity_bytes)
except Exception:  # pragma: no cover - attribute/availability differences
    _VMEM_CAP = 64 << 20


def _round_up(x, m):
    return (x + m - 1) // m * m


def _default_tm(M):
    """Row-tile choice: >=2 blocks for megacore, big tiles at scale."""
    m8 = _round_up(max(M, 1), _SUBLANE)
    # v5e/v6e (128 MiB VMEM) can hold larger row tiles than v7x (64 MiB).
    big = 512 if _VMEM_CAP >= (96 << 20) else 256
    if m8 <= _SUBLANE:
        return m8
    if m8 <= 2 * big:
        # Split into >=2 grid steps so both v7x TensorCores get work on the
        # "parallel" M axis; harmless on single-TC v5e/v6e.
        return _round_up(-(-m8 // 2), _SUBLANE)
    return big


def _resident_spec(shape):
    """BlockSpec for an operand that is constant across the grid (weights)."""
    kwargs = {}
    if hasattr(pl, "Buffered"):
        # Single-buffer: constant index_map -> never re-DMA'd, so double
        # buffering would only waste VMEM residency.
        kwargs["pipeline_mode"] = pl.Buffered(1)
    return pl.BlockSpec(shape, lambda i: (0, 0), **kwargs)


def mlp_kernel(x_ref, w1_ref, b1_ref, w2_ref, b2_ref, o_ref):
    x = x_ref[...]                                   # (tm, Cp)  MXU dtype
    w1 = w1_ref[...]                                 # (Cp, Hp)  resident
    b1 = b1_ref[...]                                 # (1, Hp)   f32
    w2 = w2_ref[...]                                 # (Hp, Op)  resident
    b2 = b2_ref[...]                                 # (1, Op)   f32

    # fc1 (+ bias) -- f32 accumulate on the MXU.
    h = jnp.dot(x, w1, preferred_element_type=jnp.float32) + b1
    # Exact GELU (matches torch.nn.GELU default): 0.5*x*(1+erf(x/sqrt(2))),
    # computed in f32 (v5e has no bf16 VPU/EUP).
    inv_sqrt2 = jnp.float32(0.7071067811865476)
    h = 0.5 * h * (1.0 + jax.lax.erf(h * inv_sqrt2))
    # fc2 (+ bias): LHS cast to the MXU dtype (bf16 path halves vld traffic).
    h = h.astype(w2.dtype)
    o = jnp.dot(h, w2, preferred_element_type=jnp.float32) + b2
    o_ref[...] = o.astype(o_ref.dtype)               # lane-dense store (Op % 128 == 0)


@functools.partial(jax.jit, static_argnums=(5, 6))
def _forward_impl(x, w1_p, b1_p, w2_p, b2_p, out_chan, tm):
    lead_shape = x.shape[:-1]
    C = x.shape[-1]
    M = math.prod(lead_shape)
    Cp, Hp = w1_p.shape
    Op = w2_p.shape[1]
    O = out_chan

    if tm is None:
        tm = _default_tm(M)
    tm = _round_up(tm, _SUBLANE)
    Mp = _round_up(M, tm)

    # --- input rows: pad only when needed, cast to the MXU dtype -------------
    x2d = x.reshape(M, C)
    if Mp != M or Cp != C:
        x2d = jnp.pad(x2d, ((0, Mp - M), (0, Cp - C)))
    x_p = x2d.astype(w1_p.dtype)

    x_bytes = x_p.dtype.itemsize
    w_bytes = w1_p.dtype.itemsize
    out_bytes = x.dtype.itemsize

    # --- cost hint (padded shapes, actual dtypes) -----------------------------
    cost = pl.CostEstimate(
        flops=2 * Mp * (Cp * Hp + Hp * Op),
        transcendentals=Mp * Hp,                     # one erf per hidden element
        bytes_accessed=(Mp * Cp * x_bytes + Cp * Hp * w_bytes + Hp * 4
                        + Hp * Op * w_bytes + Op * 4 + Mp * Op * out_bytes),
    )

    # --- VMEM budget ----------------------------------------------------------
    # x / out tiles double-buffered, weights + biases single-buffered
    # (Buffered(1)), plus the f32 hidden activation + GELU temporaries.
    vmem_needed = (
        2 * tm * Cp * x_bytes
        + (Cp * Hp + Hp * Op) * w_bytes
        + (Hp + Op) * 4
        + 2 * tm * Op * out_bytes
        + 2 * tm * Hp * 4
    )
    vmem_cap = (_VMEM_CAP * 3) // 4                  # headroom for Mosaic scratch/spill
    vmem_limit = min(max(vmem_needed + (4 << 20), 32 << 20), vmem_cap)

    out_p = pl.pallas_call(
        mlp_kernel,
        out_shape=jax.ShapeDtypeStruct((Mp, Op), x.dtype),
        grid=(Mp // tm,),
        in_specs=[
            pl.BlockSpec((tm, Cp), lambda i: (i, 0)),   # x row tile
            _resident_spec((Cp, Hp)),                   # fc1 weight (resident)
            _resident_spec((1, Hp)),                    # fc1 bias
            _resident_spec((Hp, Op)),                   # fc2 weight (resident)
            _resident_spec((1, Op)),                    # fc2 bias
        ],
        out_specs=pl.BlockSpec((tm, Op), lambda i: (i, 0)),
        compiler_params=pltpu.CompilerParams(
            dimension_semantics=("parallel",),
            vmem_limit_bytes=int(vmem_limit),
        ),
        cost_estimate=cost,
    )(x_p, w1_p, b1_p, w2_p, b2_p)

    if Mp != M or Op != O:
        out_p = out_p[:M, :O]
    return out_p.reshape(*lead_shape, O)


def make_neural_net(w1, b1, w2, b2, mxu_dtype=jnp.bfloat16, tm=None):
    """Build the fused MLP forward.  Pads/casts weights ONCE (not per call).

    w1: (C, H), b1: (H,), w2: (H, O), b2: (O,).  Returns forward(x) for
    x of shape (..., C), output (..., O) in x.dtype.
    """
    C, H = w1.shape
    O = w2.shape[1]
    Cp = _round_up(C, _LANE)
    Hp = _round_up(H, _LANE)
    Op = _round_up(O, _LANE)

    # Zero padding is exact: padded K columns contribute 0, GELU(0) = 0,
    # padded output columns are sliced off.
    w1_p = jnp.pad(w1, ((0, Cp - C), (0, Hp - H))).astype(mxu_dtype)
    b1_p = jnp.pad(b1.reshape(1, H), ((0, 0), (0, Hp - H))).astype(jnp.float32)
    w2_p = jnp.pad(w2, ((0, Hp - H), (0, Op - O))).astype(mxu_dtype)
    b2_p = jnp.pad(b2.reshape(1, O), ((0, 0), (0, Op - O))).astype(jnp.float32)

    def forward(x):
        return _forward_impl(x, w1_p, b1_p, w2_p, b2_p, O, tm)

    return forward


def _init_linear(key, fan_in, fan_out):
    # Deterministic init mimicking nn.Linear: U(-1/sqrt(fan_in), 1/sqrt(fan_in)).
    kw, kb = jax.random.split(key)
    bound = 1.0 / jnp.sqrt(float(fan_in))
    w = jax.random.uniform(kw, (fan_in, fan_out), jnp.float32, -bound, bound)
    b = jax.random.uniform(kb, (fan_out,), jnp.float32, -bound, bound)
    return w, b


if __name__ == "__main__":
    # Module config: in_chan=32, hidden_chan=64, out_chan=32; tokens (B, N)=(2, 8)
    B, N = 2, 8
    in_chan, hidden_chan, out_chan = 32, 64, 32

    key = jax.random.PRNGKey(0)
    kx, k1, k2 = jax.random.split(key, 3)

    x = jax.random.normal(kx, (B, N, in_chan), jnp.float32)
    w1, b1 = _init_linear(k1, in_chan, hidden_chan)
    w2, b2 = _init_linear(k2, hidden_chan, out_chan)

    # Reference: plain JAX f32 forward (exact-erf GELU, matches torch default).
    ref_h = x @ w1 + b1
    ref_h = 0.5 * ref_h * (1.0 + jax.lax.erf(ref_h / jnp.sqrt(2.0)))
    ref = ref_h @ w2 + b2

    # Default bf16-MXU fused kernel.
    forward = make_neural_net(w1, b1, w2, b2, mxu_dtype=jnp.bfloat16)
    out = jax.block_until_ready(forward(x))
    assert out.shape == (B, N, out_chan)
    assert out.dtype == x.dtype
    assert jnp.allclose(out, ref, atol=5e-2, rtol=5e-2), "bf16 path mismatch vs reference"

    # f32-MXU path: tight numerical parity with the torch module.
    forward_f32 = make_neural_net(w1, b1, w2, b2, mxu_dtype=jnp.float32)
    out_f32 = jax.block_until_ready(forward_f32(x))
    assert jnp.allclose(out_f32, ref, atol=1e-5, rtol=1e-5), "f32 path mismatch vs reference"

    print("KERNEL_OK")
</pallas_src>

<mosaic_0001>
module attributes {stable_mosaic.version = 11 : i64} {
  func.func @mlp_kernel(%arg0: i32, %arg1: memref<8x128xbf16, #tpu.memory_space<vmem>>, %arg2: memref<128x128xbf16, #tpu.memory_space<vmem>>, %arg3: memref<1x128xf32, #tpu.memory_space<vmem>>, %arg4: memref<128x128xbf16, #tpu.memory_space<vmem>>, %arg5: memref<1x128xf32, #tpu.memory_space<vmem>>, %arg6: memref<8x128xf32, #tpu.memory_space<vmem>>) attributes {dimension_semantics = [#tpu.dimension_semantics<parallel>], iteration_bounds = array<i64: 2>, scalar_prefetch = 0 : i64, scratch_operands = 0 : i64, tpu.core_type = #tpu.core_type<tc>, window_params = [{transform_indices = @transform_0, window_bounds = array<i64: 8, 128>}, {pipeline_mode = #tpu.pipeline_mode<synchronous>, transform_indices = @transform_1, window_bounds = array<i64: 128, 128>}, {pipeline_mode = #tpu.pipeline_mode<synchronous>, transform_indices = @transform_2, window_bounds = array<i64: 1, 128>}, {pipeline_mode = #tpu.pipeline_mode<synchronous>, transform_indices = @transform_3, window_bounds = array<i64: 128, 128>}, {pipeline_mode = #tpu.pipeline_mode<synchronous>, transform_indices = @transform_4, window_bounds = array<i64: 1, 128>}, {transform_indices = @transform_5, window_bounds = array<i64: 8, 128>}]} {
    %c0 = arith.constant 0 : index
    %c0_0 = arith.constant 0 : index
    %0 = vector.load %arg1[%c0, %c0_0] : memref<8x128xbf16, #tpu.memory_space<vmem>>, vector<8x128xbf16>
    %c0_1 = arith.constant 0 : index
    %c0_2 = arith.constant 0 : index
    %1 = vector.load %arg2[%c0_1, %c0_2] : memref<128x128xbf16, #tpu.memory_space<vmem>>, vector<128x128xbf16>
    %c0_3 = arith.constant 0 : index
    %c0_4 = arith.constant 0 : index
    %2 = vector.load %arg3[%c0_3, %c0_4] : memref<1x128xf32, #tpu.memory_space<vmem>>, vector<1x128xf32>
    %c0_5 = arith.constant 0 : index
    %c0_6 = arith.constant 0 : index
    %3 = vector.load %arg4[%c0_5, %c0_6] : memref<128x128xbf16, #tpu.memory_space<vmem>>, vector<128x128xbf16>
    %c0_7 = arith.constant 0 : index
    %c0_8 = arith.constant 0 : index
    %4 = vector.load %arg5[%c0_7, %c0_8] : memref<1x128xf32, #tpu.memory_space<vmem>>, vector<1x128xf32>
    %cst = arith.constant dense<0.000000e+00> : vector<8x128xf32>
    %5 = tpu.matmul %0, %1, %cst {dimension_numbers = #tpu.dot_dimension_numbers<[1], [0], [0], [1], [0, 0, 1, 1], [], []>} : vector<8x128xbf16>, vector<128x128xbf16>, vector<8x128xf32> -> vector<8x128xf32>
    %6 = vector.broadcast %2 : vector<1x128xf32> to vector<8x128xf32>
    %7 = arith.addf %5, %6 : vector<8x128xf32>
    %cst_9 = arith.constant 5.000000e-01 : f32
    %8 = vector.broadcast %cst_9 : f32 to vector<8x128xf32>
    %9 = arith.mulf %8, %7 : vector<8x128xf32>
    %cst_10 = arith.constant 0.707106769 : f32
    %10 = vector.broadcast %cst_10 : f32 to vector<8x128xf32>
    %11 = arith.mulf %7, %10 : vector<8x128xf32>
    %12 = math.erf %11 : vector<8x128xf32>
    %cst_11 = arith.constant 1.000000e+00 : f32
    %13 = vector.broadcast %cst_11 : f32 to vector<8x128xf32>
    %14 = arith.addf %13, %12 : vector<8x128xf32>
    %15 = arith.mulf %9, %14 : vector<8x128xf32>
    %16 = arith.truncf %15 : vector<8x128xf32> to vector<8x128xbf16>
    %cst_12 = arith.constant dense<0.000000e+00> : vector<8x128xf32>
    %17 = tpu.matmul %16, %3, %cst_12 {dimension_numbers = #tpu.dot_dimension_numbers<[1], [0], [0], [1], [0, 0, 1, 1], [], []>} : vector<8x128xbf16>, vector<128x128xbf16>, vector<8x128xf32> -> vector<8x128xf32>
    %18 = vector.broadcast %4 : vector<1x128xf32> to vector<8x128xf32>
    %19 = arith.addf %17, %18 : vector<8x128xf32>
    %c0_13 = arith.constant 0 : index
    %c0_14 = arith.constant 0 : index
    %20 = vector.load %arg6[%c0_13, %c0_14] : memref<8x128xf32, #tpu.memory_space<vmem>>, vector<8x128xf32>
    tpu.vector_store %arg6[%c0_13, %c0_14], %19 {strides = array<i32>} : memref<8x128xf32, #tpu.memory_space<vmem>>, vector<8x128xf32>,
    return
  }
  func.func @transform_0(%arg0: i32) -> (i32, i32) {
    %c0_i32 = arith.constant 0 : i32
    %c0_i32_0 = arith.constant 0 : i32
    return %arg0, %c0_i32 : i32, i32
  }
  func.func @transform_1(%arg0: i32) -> (i32, i32) {
    %c0_i32 = arith.constant 0 : i32
    %c0_i32_0 = arith.constant 0 : i32
    %c0_i32_1 = arith.constant 0 : i32
    return %c0_i32, %c0_i32_0 : i32, i32
  }
  func.func @transform_2(%arg0: i32) -> (i32, i32) {
    %c0_i32 = arith.constant 0 : i32
    %c0_i32_0 = arith.constant 0 : i32
    %c0_i32_1 = arith.constant 0 : i32
    return %c0_i32, %c0_i32_0 : i32, i32
  }
  func.func @transform_3(%arg0: i32) -> (i32, i32) {
    %c0_i32 = arith.constant 0 : i32
    %c0_i32_0 = arith.constant 0 : i32
    %c0_i32_1 = arith.constant 0 : i32
    return %c0_i32, %c0_i32_0 : i32, i32
  }
  func.func @transform_4(%arg0: i32) -> (i32, i32) {
    %c0_i32 = arith.constant 0 : i32
    %c0_i32_0 = arith.constant 0 : i32
    %c0_i32_1 = arith.constant 0 : i32
    return %c0_i32, %c0_i32_0 : i32, i32
  }
  func.func @transform_5(%arg0: i32) -> (i32, i32) {
    %c0_i32 = arith.constant 0 : i32
    %c0_i32_0 = arith.constant 0 : i32
    return %arg0, %c0_i32 : i32, i32
  }
}

</mosaic_0001>

<llo_original>
// kernel: _forward_impl.1
$region0: #{_forward_impl.1}
  #allocation0 [shape = 'u32[]', space=smem, size = 0x4, offset = 0x4, fixed_abs, tag = 'smem constant byte address 0x4 - core index']
  #allocation1 [shape = 'u32[144,128]{1,0:T(1,128)}', space=vmem, size = 0x12000, scoped, tag = 'internal scratch']
  %s0 = inlined_call_operand.vmem [shape: bf16[16,128], index: 0, kind: input, shape index: {}]
  %s1 = inlined_call_operand.hbm [shape: bf16[128,128], index: 1, kind: input, shape index: {}]
  %s2 = inlined_call_operand.vmem [shape: f32[1,128], index: 2, kind: input, shape index: {}]
  %s3 = inlined_call_operand.hbm [shape: bf16[128,128], index: 3, kind: input, shape index: {}]
  %s4 = inlined_call_operand.vmem [shape: f32[1,128], index: 4, kind: input, shape index: {}]
  %s5 = inlined_call_operand.vmem [shape: f32[16,128], index: 5, kind: output, shape index: {}]
  %s6 = sld [smem:[#allocation0]]
  $region61: #{_forward_impl.1} parent=0
    _
  %s8 = ssub.s32 1, %s6
  %s9 = scalar_select 0, %s8, %s6
  $region1: #{_forward_impl.1} parent=0
    #allocation2 [shape = 'u8[32768]{0}', space=vmem, size = 0x8000, scoped, tag = 'input window, operand 1, single buffered']
    #allocation3 [shape = 's32[2]{0}', space=sflag, size = 0x8, scoped, tag = 'scoped memory for _forward_impl.1']
    #allocation4 [shape = 'u8[32768]{0}', space=vmem, size = 0x8000, scoped, tag = 'input window, operand 3, single buffered']
    #allocation5 [shape = 's32[1]{0}', space=sflag, size = 0x4, scoped, tag = 'scoped memory for _forward_impl.1']
    %10 = vsyncpa [#allocation3], 0
    %11 = vsyncpa [#allocation5], 0
    loop: start=0, step=1, limit=4
    $region2: #{_forward_impl.1} parent=1 // loop_pre_header
      _
    $region3: #{_forward_impl.1} parent=1 // loop_header
      %s13 = sphi 0, %s17
      %p14 = scmp.ge.s32.totalorder %s13, 4
      %s23 = sphi 0, %s25
      %s26 = sphi 0, %s23
      %s27 = sphi 0, %s26
      %s43 = sphi 0, %s27
      %s47 = sphi 0, %s47
      %s49 = sphi 0, %s47
      %s50 = sphi 0, %s49
      %s64 = sphi 0, %s50
      %s68 = sphi 0, %s68
      %s70 = sphi 0, %s68
      %s71 = sphi 0, %s70
      %s85 = sphi 0, %s71
      %s89 = sphi 0, %s89
      %s91 = sphi 0, %s89
      %s92 = sphi 0, %s91
      %s106 = sphi 0, %s92
      %s110 = sphi 0, %s110
      %s112 = sphi 0, %s110
      %s113 = sphi 0, %s112
      %s127 = sphi 0, %s113
      %s133 = sphi 0, %s135
      %s136 = sphi 0, %s133
      %s137 = sphi 0, %s136
      %s153 = sphi 0, %s137
    $region4: #{_forward_impl.1} parent=1 // loop_header_branch
      %16 = sbr.rel (%p14) target = $region8
    $region5: #{_forward_impl.1} parent=1 // loop_body
      %s18 = ssub.s32 %s13, 1
      %s19 = ssub.s32 %s13, 2
      %s20 = sadd.s32 %s13, 1
      %s21 = ssub.s32 %s13, %s20
      %p22 = scmp.eq.s32.totalorder %s21, 0
      %s24 = sadd.s32 %s23, 1
      %s25 = scalar_select %p22, %s23, %s24
      %p28 = pneg %p22
      %p29 = scmp.eq.s32.totalorder %s13, 1
      %p30 = por %p28, %p29
      %p31 = scmp.ne.s32.totalorder %s23, %s26
      %p32 = scmp.eq.s32.totalorder %s13, 0
      %p33 = por %p31, %p32
      %p34 = scmp.ne.s32.totalorder %s23, %s26
      %p35 = scmp.eq.s32.totalorder %s18, 1
      %p36 = por %p34, %p35
      %p37 = scmp.ne.s32.totalorder %s26, %s27
      %p38 = scmp.eq.s32.totalorder %s18, 0
      %p39 = por %p37, %p38
      %p40 = scmp.ne.s32.totalorder %s26, %s27
      %p41 = scmp.eq.s32.totalorder %s19, 1
      %p42 = por %p40, %p41
      %p44 = scmp.ne.s32.totalorder %s27, %s43
      %p45 = scmp.eq.s32.totalorder %s19, 0
      %p46 = por %p44, %p45
      %s48 = sadd.s32 %s47, 1
      %p51 = scmp.eq.s32.totalorder %s13, 1
      %p52 = scmp.ne.s32.totalorder %s47, %s49
      %p53 = scmp.eq.s32.totalorder %s13, 0
      %p54 = por %p52, %p53
      %p55 = scmp.ne.s32.totalorder %s47, %s49
      %p56 = scmp.eq.s32.totalorder %s18, 1
      %p57 = por %p55, %p56
      %p58 = scmp.ne.s32.totalorder %s49, %s50
      %p59 = scmp.eq.s32.totalorder %s18, 0
      %p60 = por %p58, %p59
      %p61 = scmp.ne.s32.totalorder %s49, %s50
      %p62 = scmp.eq.s32.totalorder %s19, 1
      %p63 = por %p61, %p62
      %p65 = scmp.ne.s32.totalorder %s50, %s64
      %p66 = scmp.eq.s32.totalorder %s19, 0
      %p67 = por %p65, %p66
      %s69 = sadd.s32 %s68, 1
      %p72 = scmp.eq.s32.totalorder %s13, 1
      %p73 = scmp.ne.s32.totalorder %s68, %s70
      %p74 = scmp.eq.s32.totalorder %s13, 0
      %p75 = por %p73, %p74
      %p76 = scmp.ne.s32.totalorder %s68, %s70
      %p77 = scmp.eq.s32.totalorder %s18, 1
      %p78 = por %p76, %p77
      %p79 = scmp.ne.s32.totalorder %s70, %s71
      %p80 = scmp.eq.s32.totalorder %s18, 0
      %p81 = por %p79, %p80
      %p82 = scmp.ne.s32.totalorder %s70, %s71
      %p83 = scmp.eq.s32.totalorder %s19, 1
      %p84 = por %p82, %p83
      %p86 = scmp.ne.s32.totalorder %s71, %s85
      %p87 = scmp.eq.s32.totalorder %s19, 0
      %p88 = por %p86, %p87
      %s90 = sadd.s32 %s89, 1
      %p93 = scmp.eq.s32.totalorder %s13, 1
      %p94 = scmp.ne.s32.totalorder %s89, %s91
      %p95 = scmp.eq.s32.totalorder %s13, 0
      %p96 = por %p94, %p95
      %p97 = scmp.ne.s32.totalorder %s89, %s91
      %p98 = scmp.eq.s32.totalorder %s18, 1
      %p99 = por %p97, %p98
      %p100 = scmp.ne.s32.totalorder %s91, %s92
      %p101 = scmp.eq.s32.totalorder %s18, 0
      %p102 = por %p100, %p101
      %p103 = scmp.ne.s32.totalorder %s91, %s92
      %p104 = scmp.eq.s32.totalorder %s19, 1
      %p105 = por %p103, %p104
      %p107 = scmp.ne.s32.totalorder %s92, %s106
      %p108 = scmp.eq.s32.totalorder %s19, 0
      %p109 = por %p107, %p108
      %s111 = sadd.s32 %s110, 1
      %p114 = scmp.eq.s32.totalorder %s13, 1
      %p115 = scmp.ne.s32.totalorder %s110, %s112
      %p116 = scmp.eq.s32.totalorder %s13, 0
      %p117 = por %p115, %p116
      %p118 = scmp.ne.s32.totalorder %s110, %s112
      %p119 = scmp.eq.s32.totalorder %s18, 1
      %p120 = por %p118, %p119
      %p121 = scmp.ne.s32.totalorder %s112, %s113
      %p122 = scmp.eq.s32.totalorder %s18, 0
      %p123 = por %p121, %p122
      %p124 = scmp.ne.s32.totalorder %s112, %s113
      %p125 = scmp.eq.s32.totalorder %s19, 1
      %p126 = por %p124, %p125
      %p128 = scmp.ne.s32.totalorder %s113, %s127
      %p129 = scmp.eq.s32.totalorder %s19, 0
      %p130 = por %p128, %p129
      %s131 = ssub.s32 %s13, %s20
      %p132 = scmp.eq.s32.totalorder %s131, 0
      %s134 = sadd.s32 %s133, 1
      %s135 = scalar_select %p132, %s133, %s134
      %p138 = pneg %p132
      %p139 = scmp.eq.s32.totalorder %s13, 1
      %p140 = por %p138, %p139
      %p141 = scmp.ne.s32.totalorder %s133, %s136
      %p142 = scmp.eq.s32.totalorder %s13, 0
      %p143 = por %p141, %p142
      %p144 = scmp.ne.s32.totalorder %s133, %s136
      %p145 = scmp.eq.s32.totalorder %s18, 1
      %p146 = por %p144, %p145
      %p147 = scmp.ne.s32.totalorder %s136, %s137
      %p148 = scmp.eq.s32.totalorder %s18, 0
      %p149 = por %p147, %p148
      %p150 = scmp.ne.s32.totalorder %s136, %s137
      %p151 = scmp.eq.s32.totalorder %s19, 1
      %p152 = por %p150, %p151
      %p154 = scmp.ne.s32.totalorder %s137, %s153
      %p155 = scmp.eq.s32.totalorder %s19, 0
      %p156 = por %p154, %p155
      %p157 = scmp.le.s32.totalorder 1, %s13
      %p158 = scmp.lt.s32.totalorder %s13, 3
      %p159 = pnand %p157, %p158
      %p160 = pneg %p159
      // Predicated region
      $region9: #{_forward_impl.1} parent=5 // pred_check
        _
      $region10: #{_forward_impl.1} parent=5 // pred_check_branch
        %162 = sbr.rel (%p159) target = $region12
      $region11: #{_forward_impl.1} parent=5 // pred_region
        %s163 = ssub.s32 %s13, 1
        // Predicated region
        $region13: #{_forward_impl.1} parent=11 // pred_check
          %p164 = pneg %p60
        $region14: #{_forward_impl.1} parent=11 // pred_check_branch
          %166 = sbr.rel (%p164) target = $region16
        $region15: #{_forward_impl.1} parent=11 // pred_region
          %s168 = ssub.s32 1024, 1024
          %169 = vsyncadd [#allocation3], %s168
          %s170 = sshll.u32 [#allocation2], 4
          %s171 = int_to_ptr.vmem [resolvable:$true] %s170
          %176 = dma.hbm_to_vmem [thread:$0]  %s1, 1024, %s171, [#allocation3], 64, 64, 4
        $region16: #{_forward_impl.1} parent=11 // pred_fallthru
          _
        // Predicated region
        $region17: #{_forward_impl.1} parent=11 // pred_check
          %p177 = pneg %p81
        $region18: #{_forward_impl.1} parent=11 // pred_check_branch
          %179 = sbr.rel (%p177) target = $region20
        $region19: #{_forward_impl.1} parent=11 // pred_region
          _
        $region20: #{_forward_impl.1} parent=11 // pred_fallthru
          _
        // Predicated region
        $region21: #{_forward_impl.1} parent=11 // pred_check
          %p180 = pneg %p102
        $region22: #{_forward_impl.1} parent=11 // pred_check_branch
          %182 = sbr.rel (%p180) target = $region24
        $region23: #{_forward_impl.1} parent=11 // pred_region
          %s184 = ssub.s32 1024, 1024
          %185 = vsyncadd [#allocation5], %s184
          %s186 = sshll.u32 [#allocation4], 4
          %s187 = int_to_ptr.vmem [resolvable:$true] %s186
          %192 = dma.hbm_to_vmem [thread:$0]  %s3, 1024, %s187, [#allocation5], 64, 64, 4
        $region24: #{_forward_impl.1} parent=11 // pred_fallthru
          _
        // Predicated region
        $region25: #{_forward_impl.1} parent=11 // pred_check
          %p193 = pneg %p123
        $region26: #{_forward_impl.1} parent=11 // pred_check_branch
          %195 = sbr.rel (%p193) target = $region28
        $region27: #{_forward_impl.1} parent=11 // pred_region
          _
        $region28: #{_forward_impl.1} parent=11 // pred_fallthru
          _
      $region12: #{_forward_impl.1} parent=5 // pred_fallthru
        _
      %p196 = scmp.lt.s32.totalorder %s13, 2
      // Predicated region
      $region29: #{_forward_impl.1} parent=5 // pred_check
        %p197 = pneg %p196
      $region30: #{_forward_impl.1} parent=5 // pred_check_branch
        %199 = sbr.rel (%p197) target = $region32
      $region31: #{_forward_impl.1} parent=5 // pred_region
        // Predicated region
        $region33: #{_forward_impl.1} parent=31 // pred_check
          %p200 = pneg %p33
        $region34: #{_forward_impl.1} parent=31 // pred_check_branch
          %202 = sbr.rel (%p200) target = $region36
        $region35: #{_forward_impl.1} parent=31 // pred_region
          %p203 = scmp.lt.s32.totalorder %s13, 1
          %s204 = scalar_select %p203, %s13, 1
          %s205 = smul.addr %s204, 4
          %s206 = scalar_lea.vmem %s0, %s205
        $region36: #{_forward_impl.1} parent=31 // pred_fallthru
          _
      $region32: #{_forward_impl.1} parent=5 // pred_fallthru
        _
      %p207 = scmp.le.s32.totalorder 1, %s13
      %p208 = scmp.lt.s32.totalorder %s13, 3
      %p209 = pnand %p207, %p208
      %p210 = pneg %p209
      // Predicated region
      $region37: #{_forward_impl.1} parent=5 // pred_check
        _
      $region38: #{_forward_impl.1} parent=5 // pred_check_branch
        %212 = sbr.rel (%p209) target = $region40
      $region39: #{_forward_impl.1} parent=5 // pred_region
        %s213 = ssub.s32 %s13, 1
        // Predicated region
        $region41: #{_forward_impl.1} parent=39 // pred_check
          %p214 = pneg %p60
        $region42: #{_forward_impl.1} parent=39 // pred_check_branch
          %216 = sbr.rel (%p214) target = $region44
        $region43: #{_forward_impl.1} parent=39 // pred_region
          %217 = dma.done [#allocation3], 1024
        $region44: #{_forward_impl.1} parent=39 // pred_fallthru
          _
        // Predicated region
        $region45: #{_forward_impl.1} parent=39 // pred_check
          %p218 = pneg %p102
        $region46: #{_forward_impl.1} parent=39 // pred_check_branch
          %220 = sbr.rel (%p218) target = $region48
        $region47: #{_forward_impl.1} parent=39 // pred_region
          %221 = dma.done [#allocation5], 1024
        $region48: #{_forward_impl.1} parent=39 // pred_fallthru
          _
        %p222 = scmp.lt.s32.totalorder %s18, 1
        %s223 = scalar_select %p222, %s18, 1
        %s224 = smul.addr %s223, 4
        %s225 = scalar_lea.vmem %s0, %s224
        %p226 = pneg %p39
        %p227 = pneg %p36
        %p228 = pneg %p60
        %p229 = pneg %p57
        %p230 = pneg %p81
        %p231 = pneg %p78
        %p232 = pneg %p102
        %p233 = pneg %p99
        %p234 = pneg %p123
        %p235 = pneg %p120
        %p236 = pneg %p149
        %p237 = pneg %p146
        %p238 = scmp.lt.s32.totalorder %s18, 1
        %s239 = scalar_select %p238, %s18, 1
        %s240 = smul.addr %s239, 8
        %s241 = scalar_lea.vmem %s5, %s240
        %p242 = scmp.lt.s32.totalorder %s18, 1
        %s243 = scalar_select %p242, %s18, 1
        %s244 = smul.addr %s243, 4
        %s245 = scalar_lea.vmem %s0, %s244
        %p246 = scmp.lt.s32.totalorder %s18, 1
        %s247 = scalar_select %p246, %s18, 1
        %s248 = smul.addr %s247, 8
        %s249 = scalar_lea.vmem %s5, %s248
        %v251 = vld [vmem:[%s245] sm:$0xf]
        %v252 = vld [vmem:[#allocation2] sm:$0xf]
        %v253 = vld [vmem:[#allocation2 + $0x4] sm:$0xf]
        %v254 = vld [vmem:[#allocation2 + $0x8] sm:$0xf]
        %v255 = vld [vmem:[#allocation2 + $0xc] sm:$0xf]
        %v256 = vld [vmem:[#allocation2 + $0x10] sm:$0xf]
        %v257 = vld [vmem:[#allocation2 + $0x14] sm:$0xf]
        %v258 = vld [vmem:[#allocation2 + $0x18] sm:$0xf]
        %v259 = vld [vmem:[#allocation2 + $0x1c] sm:$0xf]
        %v260 = vld [vmem:[#allocation2 + $0x20] sm:$0xf]
        %v261 = vld [vmem:[#allocation2 + $0x24] sm:$0xf]
        %v262 = vld [vmem:[#allocation2 + $0x28] sm:$0xf]
        %v263 = vld [vmem:[#allocation2 + $0x2c] sm:$0xf]
        %v264 = vld [vmem:[#allocation2 + $0x30] sm:$0xf]
        %v265 = vld [vmem:[#allocation2 + $0x34] sm:$0xf]
        %v266 = vld [vmem:[#allocation2 + $0x38] sm:$0xf]
        %v267 = vld [vmem:[#allocation2 + $0x3c] sm:$0xf]
        %v268 = vld [vmem:[%s2] sm:$0x1]
        %v269 = vld [vmem:[#allocation4] sm:$0xf]
        %v270 = vld [vmem:[#allocation4 + $0x4] sm:$0xf]
        %v271 = vld [vmem:[#allocation4 + $0x8] sm:$0xf]
        %v272 = vld [vmem:[#allocation4 + $0xc] sm:$0xf]
        %v273 = vld [vmem:[#allocation4 + $0x10] sm:$0xf]
        %v274 = vld [vmem:[#allocation4 + $0x14] sm:$0xf]
        %v275 = vld [vmem:[#allocation4 + $0x18] sm:$0xf]
        %v276 = vld [vmem:[#allocation4 + $0x1c] sm:$0xf]
        %v277 = vld [vmem:[#allocation4 + $0x20] sm:$0xf]
        %v278 = vld [vmem:[#allocation4 + $0x24] sm:$0xf]
        %v279 = vld [vmem:[#allocation4 + $0x28] sm:$0xf]
        %v280 = vld [vmem:[#allocation4 + $0x2c] sm:$0xf]
        %v281 = vld [vmem:[#allocation4 + $0x30] sm:$0xf]
        %v282 = vld [vmem:[#allocation4 + $0x34] sm:$0xf]
        %v283 = vld [vmem:[#allocation4 + $0x38] sm:$0xf]
        %v284 = vld [vmem:[#allocation4 + $0x3c] sm:$0xf]
        %v285 = vld [vmem:[%s4] sm:$0x1]
        %v287 = vlaneseq
        %v288 = vshrl.u32 %v287, 7
        %v289 = vsub.s32 0, %v288
        %v290 = vrot.slane %v268, %v289
        %v308 = vunpack.c.l.b16 %v252
        %v309 = vunpack.c.l.b16 %v253
        %v310 = vunpack.c.l.b16 %v254
        %v311 = vunpack.c.l.b16 %v255
        %v312 = vunpack.c.l.b16 %v256
        %v313 = vunpack.c.l.b16 %v257
        %v314 = vunpack.c.l.b16 %v258
        %v315 = vunpack.c.l.b16 %v259
        %v316 = vunpack.c.l.b16 %v260
        %v317 = vunpack.c.l.b16 %v261
        %v318 = vunpack.c.l.b16 %v262
        %v319 = vunpack.c.l.b16 %v263
        %v320 = vunpack.c.l.b16 %v264
        %v321 = vunpack.c.l.b16 %v265
        %v322 = vunpack.c.l.b16 %v266
        %v323 = vunpack.c.l.b16 %v267
        %v324 = vpack.c.b16 %v309, %v308
        %v325 = vpack.c.b16 %v311, %v310
        %v326 = vpack.c.b16 %v313, %v312
        %v327 = vpack.c.b16 %v315, %v314
        %v328 = vpack.c.b16 %v317, %v316
        %v329 = vpack.c.b16 %v319, %v318
        %v330 = vpack.c.b16 %v321, %v320
        %v331 = vpack.c.b16 %v323, %v322
        %340 = vmatprep.subr.bf16.mxu0 0
        %341 = vmatpush1.bf16.msra.mxu0 %v331
        %342 = vmatprep.subr.bf16.mxu0 0
        %343 = vmatpush1.bf16.msra.mxu0 %v330
        %344 = vmatprep.subr.bf16.mxu0 0
        %345 = vmatpush1.bf16.msra.mxu0 %v329
        %346 = vmatprep.subr.bf16.mxu0 0
        %347 = vmatpush1.bf16.msra.mxu0 %v328
        %348 = vmatprep.subr.bf16.mxu0 0
        %349 = vmatpush1.bf16.msra.mxu0 %v327
        %350 = vmatprep.subr.bf16.mxu0 0
        %351 = vmatpush1.bf16.msra.mxu0 %v326
        %352 = vmatprep.subr.bf16.mxu0 0
        %353 = vmatpush1.bf16.msra.mxu0 %v325
        %354 = vmatprep.subr.bf16.mxu0 0
        %355 = vmatpush1.bf16.msra.mxu0 %v324
        %356 = vmatprep.subr.bf16.mxu0 0
        %357 = vmatpush2.bf16.msra.mxu0 0
        %358 = vmatprep.subr.bf16.mxu0 0
        %359 = vmatpush2.bf16.msra.mxu0 0
        %360 = vmatprep.subr.bf16.mxu0 0
        %361 = vmatpush2.bf16.msra.mxu0 0
        %362 = vmatprep.subr.bf16.mxu0 0
        %363 = vmatpush2.bf16.msra.mxu0 0
        %364 = vmatprep.subr.bf16.mxu0 0
        %365 = vmatpush2.bf16.msra.mxu0 0
        %366 = vmatprep.subr.bf16.mxu0 0
        %367 = vmatpush2.bf16.msra.mxu0 0
        %368 = vmatprep.subr.bf16.mxu0 0
        %369 = vmatpush2.bf16.msra.mxu0 0
        %370 = vmatprep.subr.bf16.mxu0 0
        %371 = vmatpush2.bf16.msra.mxu0 0
        %372 = vmatprep.mubr.bf16.mxu0 0
        %373 = vmatmul.mubr.bf16.gmra.mxu0 %v251
        %v374 = vpop.f32.mrf.mxu0
        %v375 = vadd.f32 %v290, %v374
        %v376 = vpop.f32.mrf.mxu0
        %v377 = vpop.f32.mrf.mxu0
        %v378 = vpop.f32.mrf.mxu0
        %379 = vdwg.mxu0
        %v380 = vmul.f32 %v375, 0.5
        %v381 = vmul.f32 %v375, 0.70710677
        %v382 = verf.f32.pop %v381
        %v383 = vadd.f32 %v382, 1.0
        %v384 = vmul.f32 %v380, %v383
        %v385 = vpack.c.bf16 %v384, %v384
        %v387 = vlaneseq
        %v388 = vshrl.u32 %v387, 7
        %v389 = vsub.s32 0, %v388
        %v390 = vrot.slane %v285, %v389
        %v408 = vunpack.c.l.b16 %v269
        %v409 = vunpack.c.l.b16 %v270
        %v410 = vunpack.c.l.b16 %v271
        %v411 = vunpack.c.l.b16 %v272
        %v412 = vunpack.c.l.b16 %v273
        %v413 = vunpack.c.l.b16 %v274
        %v414 = vunpack.c.l.b16 %v275
        %v415 = vunpack.c.l.b16 %v276
        %v416 = vunpack.c.l.b16 %v277
        %v417 = vunpack.c.l.b16 %v278
        %v418 = vunpack.c.l.b16 %v279
        %v419 = vunpack.c.l.b16 %v280
        %v420 = vunpack.c.l.b16 %v281
        %v421 = vunpack.c.l.b16 %v282
        %v422 = vunpack.c.l.b16 %v283
        %v423 = vunpack.c.l.b16 %v284
        %v424 = vpack.c.b16 %v409, %v408
        %v425 = vpack.c.b16 %v411, %v410
        %v426 = vpack.c.b16 %v413, %v412
        %v427 = vpack.c.b16 %v415, %v414
        %v428 = vpack.c.b16 %v417, %v416
        %v429 = vpack.c.b16 %v419, %v418
        %v430 = vpack.c.b16 %v421, %v420
        %v431 = vpack.c.b16 %v423, %v422
        %440 = vmatprep.subr.bf16.mxu0 0
        %441 = vmatpush1.bf16.msra.mxu0 %v431
        %442 = vmatprep.subr.bf16.mxu0 0
        %443 = vmatpush1.bf16.msra.mxu0 %v430
        %444 = vmatprep.subr.bf16.mxu0 0
        %445 = vmatpush1.bf16.msra.mxu0 %v429
        %446 = vmatprep.subr.bf16.mxu0 0
        %447 = vmatpush1.bf16.msra.mxu0 %v428
        %448 = vmatprep.subr.bf16.mxu0 0
        %449 = vmatpush1.bf16.msra.mxu0 %v427
        %450 = vmatprep.subr.bf16.mxu0 0
        %451 = vmatpush1.bf16.msra.mxu0 %v426
        %452 = vmatprep.subr.bf16.mxu0 0
        %453 = vmatpush1.bf16.msra.mxu0 %v425
        %454 = vmatprep.subr.bf16.mxu0 0
        %455 = vmatpush1.bf16.msra.mxu0 %v424
        %456 = vmatprep.subr.bf16.mxu0 0
        %457 = vmatpush2.bf16.msra.mxu0 0
        %458 = vmatprep.subr.bf16.mxu0 0
        %459 = vmatpush2.bf16.msra.mxu0 0
        %460 = vmatprep.subr.bf16.mxu0 0
        %461 = vmatpush2.bf16.msra.mxu0 0
        %462 = vmatprep.subr.bf16.mxu0 0
        %463 = vmatpush2.bf16.msra.mxu0 0
        %464 = vmatprep.subr.bf16.mxu0 0
        %465 = vmatpush2.bf16.msra.mxu0 0
        %466 = vmatprep.subr.bf16.mxu0 0
        %467 = vmatpush2.bf16.msra.mxu0 0
        %468 = vmatprep.subr.bf16.mxu0 0
        %469 = vmatpush2.bf16.msra.mxu0 0
        %470 = vmatprep.subr.bf16.mxu0 0
        %471 = vmatpush2.bf16.msra.mxu0 0
        %472 = vmatprep.mubr.bf16.mxu0 0
        %473 = vmatmul.mubr.bf16.gmra.mxu0 %v385
        %v474 = vpop.f32.mrf.mxu0
        %v475 = vadd.f32 %v390, %v474
        %v476 = vpop.f32.mrf.mxu0
        %v477 = vpop.f32.mrf.mxu0
        %v478 = vpop.f32.mrf.mxu0
        %479 = vdwg.mxu0
        %480 = vst [vmem:[%s249] sm:$0xff] %v475
        %p481 = scmp.lt.s32.totalorder %s18, 1
        %s482 = scalar_select %p481, %s18, 1
        %s483 = smul.addr %s482, 8
        %s484 = scalar_lea.vmem %s5, %s483
        // Predicated region
        $region49: #{_forward_impl.1} parent=39 // pred_check
          %p485 = pneg %p146
        $region50: #{_forward_impl.1} parent=39 // pred_check_branch
          %487 = sbr.rel (%p485) target = $region52
        $region51: #{_forward_impl.1} parent=39 // pred_region
          _
        $region52: #{_forward_impl.1} parent=39 // pred_fallthru
          _
      $region40: #{_forward_impl.1} parent=5 // pred_fallthru
        _
      %p488 = scmp.le.s32.totalorder 2, %s13
      // Predicated region
      $region53: #{_forward_impl.1} parent=5 // pred_check
        %p489 = pneg %p488
      $region54: #{_forward_impl.1} parent=5 // pred_check_branch
        %491 = sbr.rel (%p489) target = $region56
      $region55: #{_forward_impl.1} parent=5 // pred_region
        %s492 = ssub.s32 %s13, 2
        // Predicated region
        $region57: #{_forward_impl.1} parent=55 // pred_check
          %p493 = pneg %p152
        $region58: #{_forward_impl.1} parent=55 // pred_check_branch
          %495 = sbr.rel (%p493) target = $region60
        $region59: #{_forward_impl.1} parent=55 // pred_region
          %p496 = scmp.lt.s32.totalorder %s19, 1
          %s497 = scalar_select %p496, %s19, 1
          %s498 = smul.addr %s497, 8
          %s499 = scalar_lea.vmem %s5, %s498
        $region60: #{_forward_impl.1} parent=55 // pred_fallthru
          _
      $region56: #{_forward_impl.1} parent=5 // pred_fallthru
        _
    $region6: #{_forward_impl.1} parent=1 // loop_footer
      %s17 = sadd.s32 1, %s13
    $region7: #{_forward_impl.1} parent=1 // loop_footer_branch
      %12 = sbr.rel target = $region3
    $region8: #{_forward_impl.1} parent=1 // loop_exit
      _
    %500 = vsyncpa [#allocation3], 1
    %s501 = scalar_lea.sflag [#allocation3], 1
    %502 = vsyncpa %s501, 1
    %503 = vsyncpa [#allocation5], 1

</llo_original>
